<compile_context>
chip_gen: v7x
topology: tpu7x:2x2x1
jax: 0.10.0
libtpu: 0.0.40
codegen_flags: <defaults>
</compile_context>

<pallas_src>
import functools

import jax
import jax.numpy as jnp
from jax.experimental import pallas as pl
from jax.experimental.pallas import tpu as pltpu


def _dt_minexp_kernel(x_ref, ct_ref, csq_ref, scaler_ref, *rest, eps, has_bias):
    if has_bias:
        bias_ref, o_ref = rest
    else:
        (o_ref,) = rest

    x = x_ref[...].astype(jnp.float32)            # (tile_b, D)   streamed
    ct = ct_ref[...].astype(jnp.float32)          # (D, C)        resident
    c_sq = csq_ref[...].astype(jnp.float32)       # (1, C)        resident (precomputed ||c||^2)
    scaler = scaler_ref[...].astype(jnp.float32)  # (1, C)        resident

    # Squared Euclidean distances via the MXU: ||x||^2 + ||c||^2 - 2 x.c
    xc = jnp.dot(x, ct,
                 preferred_element_type=jnp.float32,
                 precision=jax.lax.Precision.HIGHEST)            # (tile_b, C)
    x_sq = jnp.sum(x * x, axis=-1, keepdims=True)                # (tile_b, 1)
    d2 = jnp.maximum(x_sq + c_sq - 2.0 * xc, 0.0)
    d = jnp.sqrt(d2)                                             # (tile_b, C)

    # Row-wise: subtract min, normalize by sqrt(unbiased var + eps).
    d = d - jnp.min(d, axis=-1, keepdims=True)
    n = d.shape[-1]
    mean = jnp.sum(d, axis=-1, keepdims=True) * (1.0 / n)
    var = jnp.sum((d - mean) ** 2, axis=-1, keepdims=True) * (1.0 / max(n - 1, 1))
    d = d * jax.lax.rsqrt(var + eps)

    y = jnp.exp(-d * scaler)
    if has_bias:
        y = y + bias_ref[...].astype(jnp.float32)
    o_ref[...] = y.astype(o_ref.dtype)


def _choose_tile_b(B, D, C, budget_bytes=20 << 20):
    """Largest batch tile (multiple of 8, capped) whose double-buffered x/out tiles plus
    the resident centers/scaler blocks fit a conservative VMEM budget (v7x-safe)."""
    if B <= 8:
        return B
    resident = (D * C + 2 * C) * 4                # centers_t + c_sq + scaler (f32)
    per_row = 2 * (D + C) * 4                     # double-buffered x + out tiles, f32
    avail = max(budget_bytes - resident, per_row * 8)
    tile = max(8, min(avail // per_row, B, 2048))
    if tile < B:
        tile = (tile // 8) * 8
    return int(tile)


def distance_transform_minexp(x, centers, scaler, bias=None, *, eps=1e-5, tile_b=None):
    """x: (B, D), centers: (C, D), scaler: (1, C), bias: None or (1, C). Returns (B, C)."""
    B, D = x.shape
    C, D2 = centers.shape
    assert D == D2
    assert scaler.shape == (1, C)

    # Hoisted wrapper-side prep: transposed centers (lane-dense C) and ||c||^2.
    centers_f32 = centers.astype(jnp.float32)
    centers_t = centers_f32.T                                     # (D, C)
    c_sq = jnp.sum(centers_f32 * centers_f32, axis=1).reshape(1, C)

    if tile_b is None:
        tile_b = _choose_tile_b(B, D, C)
    grid = (pl.cdiv(B, tile_b),)

    in_specs = [
        pl.BlockSpec((tile_b, D), lambda i: (i, 0)),   # x tile (streamed)
        pl.BlockSpec((D, C), lambda i: (0, 0)),        # centers^T (resident)
        pl.BlockSpec((1, C), lambda i: (0, 0)),        # ||c||^2 (resident)
        pl.BlockSpec((1, C), lambda i: (0, 0)),        # scaler (resident)
    ]
    args = [x, centers_t, c_sq, scaler]
    if bias is not None:
        assert bias.shape == (1, C)
        in_specs.append(pl.BlockSpec((1, C), lambda i: (0, 0)))
        args.append(bias)

    kernel = functools.partial(_dt_minexp_kernel, eps=float(eps), has_bias=bias is not None)
    return pl.pallas_call(
        kernel,
        out_shape=jax.ShapeDtypeStruct((B, C), x.dtype),
        grid_spec=pl.GridSpec(
            grid=grid,
            in_specs=in_specs,
            out_specs=pl.BlockSpec((tile_b, C), lambda i: (i, 0)),
        ),
        compiler_params=pltpu.CompilerParams(
            dimension_semantics=("parallel",),
            vmem_limit_bytes=32 << 20,
        ),
    )(*args)


def _dt_minexp_ref(x, centers, scaler, bias, eps):
    """Pure-JAX reference mirroring the PyTorch module (direct-difference cdist)."""
    d = jnp.sqrt(jnp.sum((x[:, None, :] - centers[None, :, :]) ** 2, axis=-1))
    d = d - jnp.min(d, axis=1, keepdims=True)
    var = jnp.var(d, axis=1, keepdims=True, ddof=1)   # torch.var default: unbiased
    d = d / jnp.sqrt(var + eps)
    out = jnp.exp(-d * scaler)
    if bias is not None:
        out = out + bias
    return out


if __name__ == "__main__":
    key = jax.random.PRNGKey(0)
    kx, kc, kb = jax.random.split(key, 3)

    batch, input_dim, num_centers = 16, 32, 128
    eps = 1e-5

    x = jax.random.normal(kx, (batch, input_dim), dtype=jnp.float32)
    # centers init: randn(C, D) / 3.0 ; scaler init: ones(1, C) * 6/3
    centers = jax.random.normal(kc, (num_centers, input_dim), dtype=jnp.float32) / 3.0
    scaler = jnp.ones((1, num_centers), dtype=jnp.float32) * (6.0 / 3.0)

    ok = True

    # Default path: bias=False (module default)
    out = jax.block_until_ready(distance_transform_minexp(x, centers, scaler, None, eps=eps))
    ref = _dt_minexp_ref(x, centers, scaler, None, eps)
    if not jnp.allclose(out, ref, atol=2e-4, rtol=2e-4):
        ok = False
        print(f"bias=None mismatch: max abs err {float(jnp.max(jnp.abs(out - ref)))}")

    # Optional bias path
    bias = jax.random.normal(kb, (1, num_centers), dtype=jnp.float32) * 0.1
    out_b = jax.block_until_ready(distance_transform_minexp(x, centers, scaler, bias, eps=eps))
    ref_b = _dt_minexp_ref(x, centers, scaler, bias, eps)
    if not jnp.allclose(out_b, ref_b, atol=2e-4, rtol=2e-4):
        ok = False
        print(f"bias mismatch: max abs err {float(jnp.max(jnp.abs(out_b - ref_b)))}")

    if ok:
        print("KERNEL_OK")
</pallas_src>

<mosaic_0001>
module attributes {stable_mosaic.version = 11 : i64} {
  func.func @_dt_minexp_kernel(%arg0: i32, %arg1: memref<16x32xf32, #tpu.memory_space<vmem>>, %arg2: memref<32x128xf32, #tpu.memory_space<vmem>>, %arg3: memref<1x128xf32, #tpu.memory_space<vmem>>, %arg4: memref<1x128xf32, #tpu.memory_space<vmem>>, %arg5: memref<16x128xf32, #tpu.memory_space<vmem>>) attributes {dimension_semantics = [#tpu.dimension_semantics<parallel>], iteration_bounds = array<i64: 1>, scalar_prefetch = 0 : i64, scratch_operands = 0 : i64, tpu.core_type = #tpu.core_type<tc>, window_params = [{transform_indices = @transform_0, window_bounds = array<i64: 16, 32>}, {pipeline_mode = #tpu.pipeline_mode<synchronous>, transform_indices = @transform_1, window_bounds = array<i64: 32, 128>}, {pipeline_mode = #tpu.pipeline_mode<synchronous>, transform_indices = @transform_2, window_bounds = array<i64: 1, 128>}, {pipeline_mode = #tpu.pipeline_mode<synchronous>, transform_indices = @transform_3, window_bounds = array<i64: 1, 128>}, {transform_indices = @transform_4, window_bounds = array<i64: 16, 128>}]} {
    %c0 = arith.constant 0 : index
    %c0_0 = arith.constant 0 : index
    %0 = vector.load %arg1[%c0, %c0_0] : memref<16x32xf32, #tpu.memory_space<vmem>>, vector<16x32xf32>
    %c0_1 = arith.constant 0 : index
    %c0_2 = arith.constant 0 : index
    %1 = vector.load %arg2[%c0_1, %c0_2] : memref<32x128xf32, #tpu.memory_space<vmem>>, vector<32x128xf32>
    %c0_3 = arith.constant 0 : index
    %c0_4 = arith.constant 0 : index
    %2 = vector.load %arg3[%c0_3, %c0_4] : memref<1x128xf32, #tpu.memory_space<vmem>>, vector<1x128xf32>
    %c0_5 = arith.constant 0 : index
    %c0_6 = arith.constant 0 : index
    %3 = vector.load %arg4[%c0_5, %c0_6] : memref<1x128xf32, #tpu.memory_space<vmem>>, vector<1x128xf32>
    %cst = arith.constant dense<0.000000e+00> : vector<16x128xf32>
    %4 = tpu.matmul %0, %1, %cst {dimension_numbers = #tpu.dot_dimension_numbers<[1], [0], [0], [1], [0, 0, 1, 1], [], []>, precision = #tpu.contract_precision<fp32>} : vector<16x32xf32>, vector<32x128xf32>, vector<16x128xf32> -> vector<16x128xf32>
    %5 = arith.mulf %0, %0 : vector<16x32xf32>
    %cst_7 = arith.constant dense<0.000000e+00> : vector<16xf32>
    %6 = vector.multi_reduction <add>, %5, %cst_7 [1] : vector<16x32xf32> to vector<16xf32>
    %7 = vector.shape_cast %6 : vector<16xf32> to vector<16x1xf32>
    %8 = vector.broadcast %7 : vector<16x1xf32> to vector<16x128xf32>
    %9 = vector.broadcast %2 : vector<1x128xf32> to vector<16x128xf32>
    %10 = arith.addf %8, %9 : vector<16x128xf32>
    %cst_8 = arith.constant 2.000000e+00 : f32
    %11 = vector.broadcast %cst_8 : f32 to vector<16x128xf32>
    %12 = arith.mulf %11, %4 : vector<16x128xf32>
    %13 = arith.subf %10, %12 : vector<16x128xf32>
    %cst_9 = arith.constant 0.000000e+00 : f32
    %14 = vector.broadcast %cst_9 : f32 to vector<16x128xf32>
    %15 = arith.maximumf %13, %14 : vector<16x128xf32>
    %16 = math.sqrt %15 : vector<16x128xf32>
    %cst_10 = arith.constant dense<0x7F800000> : vector<16xf32>
    %17 = vector.multi_reduction <minimumf>, %16, %cst_10 [1] : vector<16x128xf32> to vector<16xf32>
    %18 = vector.shape_cast %17 : vector<16xf32> to vector<16x1xf32>
    %19 = vector.broadcast %18 : vector<16x1xf32> to vector<16x128xf32>
    %20 = arith.subf %16, %19 : vector<16x128xf32>
    %cst_11 = arith.constant dense<0.000000e+00> : vector<16xf32>
    %21 = vector.multi_reduction <add>, %20, %cst_11 [1] : vector<16x128xf32> to vector<16xf32>
    %22 = vector.shape_cast %21 : vector<16xf32> to vector<16x1xf32>
    %cst_12 = arith.constant 7.812500e-03 : f32
    %23 = vector.broadcast %cst_12 : f32 to vector<16x1xf32>
    %24 = arith.mulf %22, %23 : vector<16x1xf32>
    %25 = vector.broadcast %24 : vector<16x1xf32> to vector<16x128xf32>
    %26 = arith.subf %20, %25 : vector<16x128xf32>
    %27 = arith.mulf %26, %26 : vector<16x128xf32>
    %cst_13 = arith.constant dense<0.000000e+00> : vector<16xf32>
    %28 = vector.multi_reduction <add>, %27, %cst_13 [1] : vector<16x128xf32> to vector<16xf32>
    %29 = vector.shape_cast %28 : vector<16xf32> to vector<16x1xf32>
    %cst_14 = arith.constant 0.00787401571 : f32
    %30 = vector.broadcast %cst_14 : f32 to vector<16x1xf32>
    %31 = arith.mulf %29, %30 : vector<16x1xf32>
    %cst_15 = arith.constant 9.99999974E-6 : f32
    %32 = vector.broadcast %cst_15 : f32 to vector<16x1xf32>
    %33 = arith.addf %31, %32 : vector<16x1xf32>
    %34 = math.rsqrt %33 : vector<16x1xf32>
    %35 = vector.broadcast %34 : vector<16x1xf32> to vector<16x128xf32>
    %36 = arith.mulf %20, %35 : vector<16x128xf32>
    %cst_16 = arith.constant 0.000000e+00 : f32
    %37 = vector.broadcast %cst_16 : f32 to vector<16x128xf32>
    %38 = arith.subf %37, %36 : vector<16x128xf32>
    %39 = vector.broadcast %3 : vector<1x128xf32> to vector<16x128xf32>
    %40 = arith.mulf %38, %39 : vector<16x128xf32>
    %41 = math.exp %40 : vector<16x128xf32>
    %c0_17 = arith.constant 0 : index
    %c0_18 = arith.constant 0 : index
    %42 = vector.load %arg5[%c0_17, %c0_18] : memref<16x128xf32, #tpu.memory_space<vmem>>, vector<16x128xf32>
    tpu.vector_store %arg5[%c0_17, %c0_18], %41 {strides = array<i32>} : memref<16x128xf32, #tpu.memory_space<vmem>>, vector<16x128xf32>,
    return
  }
  func.func @transform_0(%arg0: i32) -> (i32, i32) {
    %c0_i32 = arith.constant 0 : i32
    %c0_i32_0 = arith.constant 0 : i32
    return %arg0, %c0_i32 : i32, i32
  }
  func.func @transform_1(%arg0: i32) -> (i32, i32) {
    %c0_i32 = arith.constant 0 : i32
    %c0_i32_0 = arith.constant 0 : i32
    %c0_i32_1 = arith.constant 0 : i32
    return %c0_i32, %c0_i32_0 : i32, i32
  }
  func.func @transform_2(%arg0: i32) -> (i32, i32) {
    %c0_i32 = arith.constant 0 : i32
    %c0_i32_0 = arith.constant 0 : i32
    %c0_i32_1 = arith.constant 0 : i32
    return %c0_i32, %c0_i32_0 : i32, i32
  }
  func.func @transform_3(%arg0: i32) -> (i32, i32) {
    %c0_i32 = arith.constant 0 : i32
    %c0_i32_0 = arith.constant 0 : i32
    %c0_i32_1 = arith.constant 0 : i32
    return %c0_i32, %c0_i32_0 : i32, i32
  }
  func.func @transform_4(%arg0: i32) -> (i32, i32) {
    %c0_i32 = arith.constant 0 : i32
    %c0_i32_0 = arith.constant 0 : i32
    return %arg0, %c0_i32 : i32, i32
  }
}

</mosaic_0001>

<llo_original>
// kernel: tpu_custom_call.1
$region0: #{tpu_custom_call.1}
  #allocation0 [shape = 'u32[]', space=smem, size = 0x4, offset = 0x4, fixed_abs, tag = 'smem constant byte address 0x4 - core index']
  #allocation1 [shape = 'u32[144,128]{1,0:T(1,128)}', space=vmem, size = 0x12000, scoped, tag = 'internal scratch']
  %s0 = inlined_call_operand.hbm [shape: f32[16,32], index: 0, kind: input, shape index: {}]
  %s1 = inlined_call_operand.hbm [shape: f32[32,128], index: 1, kind: input, shape index: {}]
  %s2 = inlined_call_operand.vmem [shape: f32[1,128], index: 2, kind: input, shape index: {}]
  %s3 = inlined_call_operand.vmem [shape: f32[1,128], index: 3, kind: input, shape index: {}]
  %s4 = inlined_call_operand.hbm [shape: f32[16,128], index: 4, kind: output, shape index: {}]
  %s5 = sld [smem:[#allocation0]]
  $region34: #{tpu_custom_call.1} parent=0
    _
  %s7 = ssub.s32 1, %s5
  %s8 = scalar_select 0, %s7, %s5
  $region1: #{tpu_custom_call.1} parent=0
    #allocation2 [shape = 'u8[8192]{0}', space=vmem, size = 0x2000, scoped, tag = 'input window, operand 0, single buffered']
    #allocation3 [shape = 's32[1]{0}', space=sflag, size = 0x4, scoped, tag = 'scoped memory for tpu_custom_call.1']
    #allocation4 [shape = 's32[1]{0}', space=sflag, size = 0x4, scoped, tag = 'scoped memory for tpu_custom_call.1']
    #allocation5 [shape = 'u8[16384]{0}', space=vmem, size = 0x4000, scoped, tag = 'input window, operand 1, single buffered']
    #allocation6 [shape = 's32[1]{0}', space=sflag, size = 0x4, scoped, tag = 'scoped memory for tpu_custom_call.1']
    #allocation7 [shape = 'u8[8192]{0}', space=vmem, size = 0x2000, scoped, tag = 'output window, operand 0, single buffered']
    %9 = vsyncpa [#allocation3], 0
    %10 = vsyncpa [#allocation6], 0
    %11 = vsyncpa [#allocation4], 0
    // Predicated region
    $region2: #{tpu_custom_call.1} parent=1 // pred_check
      _
    $region3: #{tpu_custom_call.1} parent=1 // pred_check_branch
      %13 = sbr.rel (0) target = $region5
    $region4: #{tpu_custom_call.1} parent=1 // pred_region
      %s15 = ssub.s32 256, 256
      %16 = vsyncadd [#allocation3], %s15
      %s17 = sshll.u32 [#allocation2], 4
      %s18 = int_to_ptr.vmem [resolvable:$true] %s17
      %23 = dma.hbm_to_vmem [thread:$0]  %s0, 256, %s18, [#allocation3], 128, 128, 8
    $region5: #{tpu_custom_call.1} parent=1 // pred_fallthru
      _
    // Predicated region
    $region6: #{tpu_custom_call.1} parent=1 // pred_check
      _
    $region7: #{tpu_custom_call.1} parent=1 // pred_check_branch
      %25 = sbr.rel (0) target = $region9
    $region8: #{tpu_custom_call.1} parent=1 // pred_region
      %s27 = ssub.s32 512, 512
      %28 = vsyncadd [#allocation6], %s27
      %s29 = sshll.u32 [#allocation5], 4
      %s30 = int_to_ptr.vmem [resolvable:$true] %s29
      %35 = dma.hbm_to_vmem [thread:$0]  %s1, 512, %s30, [#allocation6], 128, 128, 8
    $region9: #{tpu_custom_call.1} parent=1 // pred_fallthru
      _
    // Predicated region
    $region10: #{tpu_custom_call.1} parent=1 // pred_check
      _
    $region11: #{tpu_custom_call.1} parent=1 // pred_check_branch
      %37 = sbr.rel (0) target = $region13
    $region12: #{tpu_custom_call.1} parent=1 // pred_region
      _
    $region13: #{tpu_custom_call.1} parent=1 // pred_fallthru
      _
    // Predicated region
    $region14: #{tpu_custom_call.1} parent=1 // pred_check
      _
    $region15: #{tpu_custom_call.1} parent=1 // pred_check_branch
      %39 = sbr.rel (0) target = $region17
    $region16: #{tpu_custom_call.1} parent=1 // pred_region
      _
    $region17: #{tpu_custom_call.1} parent=1 // pred_fallthru
      _
    // Predicated region
    $region18: #{tpu_custom_call.1} parent=1 // pred_check
      _
    $region19: #{tpu_custom_call.1} parent=1 // pred_check_branch
      %41 = sbr.rel (0) target = $region21
    $region20: #{tpu_custom_call.1} parent=1 // pred_region
      %42 = dma.done [#allocation3], 256
    $region21: #{tpu_custom_call.1} parent=1 // pred_fallthru
      _
    // Predicated region
    $region22: #{tpu_custom_call.1} parent=1 // pred_check
      _
    $region23: #{tpu_custom_call.1} parent=1 // pred_check_branch
      %44 = sbr.rel (0) target = $region25
    $region24: #{tpu_custom_call.1} parent=1 // pred_region
      %45 = dma.done [#allocation6], 512
    $region25: #{tpu_custom_call.1} parent=1 // pred_fallthru
      _
    %v46 = vld [vmem:[#allocation2] sm:$0xff]
    %v47 = vld [vmem:[#allocation2 + $0x8] sm:$0xff]
    %v48 = vld [vmem:[#allocation5] sm:$0xff]
    %v49 = vld [vmem:[#allocation5 + $0x8] sm:$0xff]
    %v50 = vld [vmem:[#allocation5 + $0x10] sm:$0xff]
    %v51 = vld [vmem:[#allocation5 + $0x18] sm:$0xff]
    %v52 = vld [vmem:[%s2] sm:$0x1]
    %v53 = vld [vmem:[%s3] sm:$0x1]
    %vm54 = vcmask 261120
    %v56 = vsel %vm54, %v46, 0
    %v59 = vsel %vm54, %v47, 0
    %61 = vmatprep.subr.mxu0 0.0
    %v62 = vand.u32 %v48, 4294901760
    %63 = vmatpush1.msra.mxu0 %v62
    %64 = vmatprep.subr.mxu0 0.0
    %v65 = vand.u32 %v49, 4294901760
    %66 = vmatpush1.msra.mxu0 %v65
    %67 = vmatprep.subr.mxu0 0.0
    %v68 = vand.u32 %v50, 4294901760
    %69 = vmatpush1.msra.mxu0 %v68
    %70 = vmatprep.subr.mxu0 0.0
    %v71 = vand.u32 %v51, 4294901760
    %72 = vmatpush1.msra.mxu0 %v71
    %73 = vmatprep.subr.mxu0 0.0
    %74 = vmatpush1.msra.mxu0 0.0
    %75 = vmatprep.subr.mxu0 0.0
    %76 = vmatpush1.msra.mxu0 0.0
    %77 = vmatprep.subr.mxu0 0.0
    %78 = vmatpush1.msra.mxu0 0.0
    %79 = vmatprep.subr.mxu0 0.0
    %80 = vmatpush1.msra.mxu0 0.0
    %81 = vmatprep.subr.mxu0 0.0
    %82 = vmatpush1.msra.mxu0 0.0
    %83 = vmatprep.subr.mxu0 0.0
    %84 = vmatpush1.msra.mxu0 0.0
    %85 = vmatprep.subr.mxu0 0.0
    %86 = vmatpush1.msra.mxu0 0.0
    %87 = vmatprep.subr.mxu0 0.0
    %88 = vmatpush1.msra.mxu0 0.0
    %89 = vmatprep.subr.mxu0 0.0
    %90 = vmatpush1.msra.mxu0 0.0
    %91 = vmatprep.subr.mxu0 0.0
    %92 = vmatpush1.msra.mxu0 0.0
    %93 = vmatprep.subr.mxu0 0.0
    %94 = vmatpush1.msra.mxu0 0.0
    %95 = vmatprep.subr.mxu0 0.0
    %96 = vmatpush1.msra.mxu0 0.0
    %97 = vmatprep.subr.mxu0 0.0
    %98 = vmatpush1.msra.mxu0 0.0
    %99 = vmatprep.subr.mxu0 0.0
    %100 = vmatpush1.msra.mxu0 0.0
    %101 = vmatprep.subr.mxu0 0.0
    %102 = vmatpush1.msra.mxu0 0.0
    %103 = vmatprep.subr.mxu0 0.0
    %104 = vmatpush1.msra.mxu0 0.0
    %105 = vmatprep.subr.mxu0 0.0
    %106 = vmatpush1.msra.mxu0 0.0
    %107 = vmatprep.subr.mxu0 0.0
    %108 = vmatpush1.msra.mxu0 0.0
    %109 = vmatprep.subr.mxu0 0.0
    %110 = vmatpush1.msra.mxu0 0.0
    %111 = vmatprep.subr.mxu0 0.0
    %112 = vmatpush1.msra.mxu0 0.0
    %113 = vmatprep.subr.mxu0 0.0
    %114 = vmatpush1.msra.mxu0 0.0
    %115 = vmatprep.subr.mxu0 0.0
    %116 = vmatpush1.msra.mxu0 0.0
    %117 = vmatprep.subr.mxu0 0.0
    %118 = vmatpush1.msra.mxu0 0.0
    %119 = vmatprep.subr.mxu0 0.0
    %120 = vmatpush1.msra.mxu0 0.0
    %121 = vmatprep.subr.mxu0 0.0
    %122 = vmatpush1.msra.mxu0 0.0
    %123 = vmatprep.subr.mxu0 0.0
    %124 = vmatpush1.msra.mxu0 0.0
    %125 = vmatprep.subr.mxu0 0.0
    %126 = vmatpush1.msra.mxu0 0.0
    %127 = vmatprep.subr.mxu0 0.0
    %128 = vmatpush1.msra.mxu0 0.0
    %129 = vmatprep.mubr.f32.mxu0 0.0
    %v130 = vand.u32 %v56, 4294901760
    %v131 = vsub.f32 %v56, %v130
    %v132 = vand.u32 %v131, 4294901760
    %v133 = vsub.f32 %v131, %v132
    %v134 = vand.u32 %v133, 4294901760
    %135 = vmatmul.mubr.f32.gmra.mrb[0].mxu0 %v134
    %v136 = vpop.f32.mrb[0].mxu0
    %v137 = vadd.f32 0.0, %v136
    %v138 = vpop.f32.mrb[0].mxu0
    %139 = vmatprep.mubr.f32.mxu0 0.0
    %v140 = vand.u32 %v59, 4294901760
    %v141 = vsub.f32 %v59, %v140
    %v142 = vand.u32 %v141, 4294901760
    %v143 = vsub.f32 %v141, %v142
    %v144 = vand.u32 %v143, 4294901760
    %145 = vmatmul.mubr.f32.gmra.mrb[0].mxu0 %v144
    %v146 = vpop.f32.mrb[0].mxu0
    %v147 = vadd.f32 0.0, %v146
    %v148 = vpop.f32.mrb[0].mxu0
    %149 = vdwg.mxu0
    %150 = vmatprep.subr.mxu0 0.0
    %v151 = vand.u32 %v48, 4294901760
    %v152 = vsub.f32 %v48, %v151
    %v153 = vand.u32 %v152, 4294901760
    %v154 = vsub.f32 %v152, %v153
    %v155 = vand.u32 %v154, 4294901760
    %156 = vmatpush1.msra.mxu0 %v155
    %157 = vmatprep.subr.mxu0 0.0
    %v158 = vand.u32 %v49, 4294901760
    %v159 = vsub.f32 %v49, %v158
    %v160 = vand.u32 %v159, 4294901760
    %v161 = vsub.f32 %v159, %v160
    %v162 = vand.u32 %v161, 4294901760
    %163 = vmatpush1.msra.mxu0 %v162
    %164 = vmatprep.subr.mxu0 0.0
    %v165 = vand.u32 %v50, 4294901760
    %v166 = vsub.f32 %v50, %v165
    %v167 = vand.u32 %v166, 4294901760
    %v168 = vsub.f32 %v166, %v167
    %v169 = vand.u32 %v168, 4294901760
    %170 = vmatpush1.msra.mxu0 %v169
    %171 = vmatprep.subr.mxu0 0.0
    %v172 = vand.u32 %v51, 4294901760
    %v173 = vsub.f32 %v51, %v172
    %v174 = vand.u32 %v173, 4294901760
    %v175 = vsub.f32 %v173, %v174
    %v176 = vand.u32 %v175, 4294901760
    %177 = vmatpush1.msra.mxu0 %v176
    %178 = vmatprep.subr.mxu0 0.0
    %179 = vmatpush1.msra.mxu0 0.0
    %180 = vmatprep.subr.mxu0 0.0
    %181 = vmatpush1.msra.mxu0 0.0
    %182 = vmatprep.subr.mxu0 0.0
    %183 = vmatpush1.msra.mxu0 0.0
    %184 = vmatprep.subr.mxu0 0.0
    %185 = vmatpush1.msra.mxu0 0.0
    %186 = vmatprep.subr.mxu0 0.0
    %187 = vmatpush1.msra.mxu0 0.0
    %188 = vmatprep.subr.mxu0 0.0
    %189 = vmatpush1.msra.mxu0 0.0
    %190 = vmatprep.subr.mxu0 0.0
    %191 = vmatpush1.msra.mxu0 0.0
    %192 = vmatprep.subr.mxu0 0.0
    %193 = vmatpush1.msra.mxu0 0.0
    %194 = vmatprep.subr.mxu0 0.0
    %195 = vmatpush1.msra.mxu0 0.0
    %196 = vmatprep.subr.mxu0 0.0
    %197 = vmatpush1.msra.mxu0 0.0
    %198 = vmatprep.subr.mxu0 0.0
    %199 = vmatpush1.msra.mxu0 0.0
    %200 = vmatprep.subr.mxu0 0.0
    %201 = vmatpush1.msra.mxu0 0.0
    %202 = vmatprep.subr.mxu0 0.0
    %203 = vmatpush1.msra.mxu0 0.0
    %204 = vmatprep.subr.mxu0 0.0
    %205 = vmatpush1.msra.mxu0 0.0
    %206 = vmatprep.subr.mxu0 0.0
    %207 = vmatpush1.msra.mxu0 0.0
    %208 = vmatprep.subr.mxu0 0.0
    %209 = vmatpush1.msra.mxu0 0.0
    %210 = vmatprep.subr.mxu0 0.0
    %211 = vmatpush1.msra.mxu0 0.0
    %212 = vmatprep.subr.mxu0 0.0
    %213 = vmatpush1.msra.mxu0 0.0
    %214 = vmatprep.subr.mxu0 0.0
    %215 = vmatpush1.msra.mxu0 0.0
    %216 = vmatprep.subr.mxu0 0.0
    %217 = vmatpush1.msra.mxu0 0.0
    %218 = vmatprep.subr.mxu0 0.0
    %219 = vmatpush1.msra.mxu0 0.0
    %220 = vmatprep.subr.mxu0 0.0
    %221 = vmatpush1.msra.mxu0 0.0
    %222 = vmatprep.subr.mxu0 0.0
    %223 = vmatpush1.msra.mxu0 0.0
    %224 = vmatprep.subr.mxu0 0.0
    %225 = vmatpush1.msra.mxu0 0.0
    %226 = vmatprep.subr.mxu0 0.0
    %227 = vmatpush1.msra.mxu0 0.0
    %228 = vmatprep.subr.mxu0 0.0
    %229 = vmatpush1.msra.mxu0 0.0
    %230 = vmatprep.subr.mxu0 0.0
    %231 = vmatpush1.msra.mxu0 0.0
    %232 = vmatprep.subr.mxu0 0.0
    %233 = vmatpush1.msra.mxu0 0.0
    %234 = vmatprep.mubr.f32.mxu0 0.0
    %v235 = vand.u32 %v56, 4294901760
    %236 = vmatmul.mubr.f32.gmra.mrb[0].mxu0 %v235
    %v237 = vpop.f32.mrb[0].mxu0
    %v238 = vadd.f32 %v137, %v237
    %v239 = vpop.f32.mrb[0].mxu0
    %240 = vmatprep.mubr.f32.mxu0 0.0
    %v241 = vand.u32 %v59, 4294901760
    %242 = vmatmul.mubr.f32.gmra.mrb[0].mxu0 %v241
    %v243 = vpop.f32.mrb[0].mxu0
    %v244 = vadd.f32 %v147, %v243
    %v245 = vpop.f32.mrb[0].mxu0
    %246 = vdwg.mxu0
    %247 = vmatprep.subr.mxu0 0.0
    %v248 = vand.u32 %v48, 4294901760
    %v249 = vsub.f32 %v48, %v248
    %250 = vmatpush1.msra.mxu0 %v249
    %251 = vmatprep.subr.mxu0 0.0
    %v252 = vand.u32 %v49, 4294901760
    %v253 = vsub.f32 %v49, %v252
    %254 = vmatpush1.msra.mxu0 %v253
    %255 = vmatprep.subr.mxu0 0.0
    %v256 = vand.u32 %v50, 4294901760
    %v257 = vsub.f32 %v50, %v256
    %258 = vmatpush1.msra.mxu0 %v257
    %259 = vmatprep.subr.mxu0 0.0
    %v260 = vand.u32 %v51, 4294901760
    %v261 = vsub.f32 %v51, %v260
    %262 = vmatpush1.msra.mxu0 %v261
    %263 = vmatprep.subr.mxu0 0.0
    %264 = vmatpush1.msra.mxu0 0.0
    %265 = vmatprep.subr.mxu0 0.0
    %266 = vmatpush1.msra.mxu0 0.0
    %267 = vmatprep.subr.mxu0 0.0
    %268 = vmatpush1.msra.mxu0 0.0
    %269 = vmatprep.subr.mxu0 0.0
    %270 = vmatpush1.msra.mxu0 0.0
    %271 = vmatprep.subr.mxu0 0.0
    %272 = vmatpush1.msra.mxu0 0.0
    %273 = vmatprep.subr.mxu0 0.0
    %274 = vmatpush1.msra.mxu0 0.0
    %275 = vmatprep.subr.mxu0 0.0
    %276 = vmatpush1.msra.mxu0 0.0
    %277 = vmatprep.subr.mxu0 0.0
    %278 = vmatpush1.msra.mxu0 0.0
    %279 = vmatprep.subr.mxu0 0.0
    %280 = vmatpush1.msra.mxu0 0.0
    %281 = vmatprep.subr.mxu0 0.0
    %282 = vmatpush1.msra.mxu0 0.0
    %283 = vmatprep.subr.mxu0 0.0
    %284 = vmatpush1.msra.mxu0 0.0
    %285 = vmatprep.subr.mxu0 0.0
    %286 = vmatpush1.msra.mxu0 0.0
    %287 = vmatprep.subr.mxu0 0.0
    %288 = vmatpush1.msra.mxu0 0.0
    %289 = vmatprep.subr.mxu0 0.0
    %290 = vmatpush1.msra.mxu0 0.0
    %291 = vmatprep.subr.mxu0 0.0
    %292 = vmatpush1.msra.mxu0 0.0
    %293 = vmatprep.subr.mxu0 0.0
    %294 = vmatpush1.msra.mxu0 0.0
    %295 = vmatprep.subr.mxu0 0.0
    %296 = vmatpush1.msra.mxu0 0.0
    %297 = vmatprep.subr.mxu0 0.0
    %298 = vmatpush1.msra.mxu0 0.0
    %299 = vmatprep.subr.mxu0 0.0
    %300 = vmatpush1.msra.mxu0 0.0
    %301 = vmatprep.subr.mxu0 0.0
    %302 = vmatpush1.msra.mxu0 0.0
    %303 = vmatprep.subr.mxu0 0.0
    %304 = vmatpush1.msra.mxu0 0.0
    %305 = vmatprep.subr.mxu0 0.0
    %306 = vmatpush1.msra.mxu0 0.0
    %307 = vmatprep.subr.mxu0 0.0
    %308 = vmatpush1.msra.mxu0 0.0
    %309 = vmatprep.subr.mxu0 0.0
    %310 = vmatpush1.msra.mxu0 0.0
    %311 = vmatprep.subr.mxu0 0.0
    %312 = vmatpush1.msra.mxu0 0.0
    %313 = vmatprep.subr.mxu0 0.0
    %314 = vmatpush1.msra.mxu0 0.0
    %315 = vmatprep.subr.mxu0 0.0
    %316 = vmatpush1.msra.mxu0 0.0
    %317 = vmatprep.subr.mxu0 0.0
    %318 = vmatpush1.msra.mxu0 0.0
    %319 = vmatprep.mubr.f32.mxu0 0.0
    %v320 = vand.u32 %v56, 4294901760
    %v321 = vsub.f32 %v56, %v320
    %322 = vmatmul.mubr.f32.gmra.mrb[0].mxu0 %v321
    %v323 = vpop.f32.mrb[0].mxu0
    %v324 = vadd.f32 %v238, %v323
    %v325 = vpop.f32.mrb[0].mxu0
    %326 = vmatprep.mubr.f32.mxu0 0.0
    %v327 = vand.u32 %v59, 4294901760
    %v328 = vsub.f32 %v59, %v327
    %329 = vmatmul.mubr.f32.gmra.mrb[0].mxu0 %v328
    %v330 = vpop.f32.mrb[0].mxu0
    %v331 = vadd.f32 %v244, %v330
    %v332 = vpop.f32.mrb[0].mxu0
    %333 = vdwg.mxu0
    %334 = vmatprep.subr.mxu0 0.0
    %v335 = vand.u32 %v48, 4294901760
    %336 = vmatpush1.msra.mxu0 %v335
    %337 = vmatprep.subr.mxu0 0.0
    %v338 = vand.u32 %v49, 4294901760
    %339 = vmatpush1.msra.mxu0 %v338
    %340 = vmatprep.subr.mxu0 0.0
    %v341 = vand.u32 %v50, 4294901760
    %342 = vmatpush1.msra.mxu0 %v341
    %343 = vmatprep.subr.mxu0 0.0
    %v344 = vand.u32 %v51, 4294901760
    %345 = vmatpush1.msra.mxu0 %v344
    %346 = vmatprep.subr.mxu0 0.0
    %347 = vmatpush1.msra.mxu0 0.0
    %348 = vmatprep.subr.mxu0 0.0
    %349 = vmatpush1.msra.mxu0 0.0
    %350 = vmatprep.subr.mxu0 0.0
    %351 = vmatpush1.msra.mxu0 0.0
    %352 = vmatprep.subr.mxu0 0.0
    %353 = vmatpush1.msra.mxu0 0.0
    %354 = vmatprep.subr.mxu0 0.0
    %355 = vmatpush1.msra.mxu0 0.0
    %356 = vmatprep.subr.mxu0 0.0
    %357 = vmatpush1.msra.mxu0 0.0
    %358 = vmatprep.subr.mxu0 0.0
    %359 = vmatpush1.msra.mxu0 0.0
    %360 = vmatprep.subr.mxu0 0.0
    %361 = vmatpush1.msra.mxu0 0.0
    %362 = vmatprep.subr.mxu0 0.0
    %363 = vmatpush1.msra.mxu0 0.0
    %364 = vmatprep.subr.mxu0 0.0
    %365 = vmatpush1.msra.mxu0 0.0
    %366 = vmatprep.subr.mxu0 0.0
    %367 = vmatpush1.msra.mxu0 0.0
    %368 = vmatprep.subr.mxu0 0.0
    %369 = vmatpush1.msra.mxu0 0.0
    %370 = vmatprep.subr.mxu0 0.0
    %371 = vmatpush1.msra.mxu0 0.0
    %372 = vmatprep.subr.mxu0 0.0
    %373 = vmatpush1.msra.mxu0 0.0
    %374 = vmatprep.subr.mxu0 0.0
    %375 = vmatpush1.msra.mxu0 0.0
    %376 = vmatprep.subr.mxu0 0.0
    %377 = vmatpush1.msra.mxu0 0.0
    %378 = vmatprep.subr.mxu0 0.0
    %379 = vmatpush1.msra.mxu0 0.0
    %380 = vmatprep.subr.mxu0 0.0
    %381 = vmatpush1.msra.mxu0 0.0
    %382 = vmatprep.subr.mxu0 0.0
    %383 = vmatpush1.msra.mxu0 0.0
    %384 = vmatprep.subr.mxu0 0.0
    %385 = vmatpush1.msra.mxu0 0.0
    %386 = vmatprep.subr.mxu0 0.0
    %387 = vmatpush1.msra.mxu0 0.0
    %388 = vmatprep.subr.mxu0 0.0
    %389 = vmatpush1.msra.mxu0 0.0
    %390 = vmatprep.subr.mxu0 0.0
    %391 = vmatpush1.msra.mxu0 0.0
    %392 = vmatprep.subr.mxu0 0.0
    %393 = vmatpush1.msra.mxu0 0.0
    %394 = vmatprep.subr.mxu0 0.0
    %395 = vmatpush1.msra.mxu0 0.0
    %396 = vmatprep.subr.mxu0 0.0
    %397 = vmatpush1.msra.mxu0 0.0
    %398 = vmatprep.subr.mxu0 0.0
    %399 = vmatpush1.msra.mxu0 0.0
    %400 = vmatprep.subr.mxu0 0.0
    %401 = vmatpush1.msra.mxu0 0.0
    %402 = vmatprep.mubr.f32.mxu0 0.0
    %v403 = vand.u32 %v56, 4294901760
    %v404 = vsub.f32 %v56, %v403
    %v405 = vand.u32 %v404, 4294901760
    %406 = vmatmul.mubr.f32.gmra.mrb[0].mxu0 %v405
    %v407 = vpop.f32.mrb[0].mxu0
    %v408 = vadd.f32 %v324, %v407
    %v409 = vpop.f32.mrb[0].mxu0
    %410 = vmatprep.mubr.f32.mxu0 0.0
    %v411 = vand.u32 %v59, 4294901760
    %v412 = vsub.f32 %v59, %v411
    %v413 = vand.u32 %v412, 4294901760
    %414 = vmatmul.mubr.f32.gmra.mrb[0].mxu0 %v413
    %v415 = vpop.f32.mrb[0].mxu0
    %v416 = vadd.f32 %v331, %v415
    %v417 = vpop.f32.mrb[0].mxu0
    %418 = vdwg.mxu0
    %419 = vmatprep.subr.mxu0 0.0
    %v420 = vand.u32 %v48, 4294901760
    %v421 = vsub.f32 %v48, %v420
    %v422 = vand.u32 %v421, 4294901760
    %423 = vmatpush1.msra.mxu0 %v422
    %424 = vmatprep.subr.mxu0 0.0
    %v425 = vand.u32 %v49, 4294901760
    %v426 = vsub.f32 %v49, %v425
    %v427 = vand.u32 %v426, 4294901760
    %428 = vmatpush1.msra.mxu0 %v427
    %429 = vmatprep.subr.mxu0 0.0
    %v430 = vand.u32 %v50, 4294901760
    %v431 = vsub.f32 %v50, %v430
    %v432 = vand.u32 %v431, 4294901760
    %433 = vmatpush1.msra.mxu0 %v432
    %434 = vmatprep.subr.mxu0 0.0
    %v435 = vand.u32 %v51, 4294901760
    %v436 = vsub.f32 %v51, %v435
    %v437 = vand.u32 %v436, 4294901760
    %438 = vmatpush1.msra.mxu0 %v437
    %439 = vmatprep.subr.mxu0 0.0
    %440 = vmatpush1.msra.mxu0 0.0
    %441 = vmatprep.subr.mxu0 0.0
    %442 = vmatpush1.msra.mxu0 0.0
    %443 = vmatprep.subr.mxu0 0.0
    %444 = vmatpush1.msra.mxu0 0.0
    %445 = vmatprep.subr.mxu0 0.0
    %446 = vmatpush1.msra.mxu0 0.0
    %447 = vmatprep.subr.mxu0 0.0
    %448 = vmatpush1.msra.mxu0 0.0
    %449 = vmatprep.subr.mxu0 0.0
    %450 = vmatpush1.msra.mxu0 0.0
    %451 = vmatprep.subr.mxu0 0.0
    %452 = vmatpush1.msra.mxu0 0.0
    %453 = vmatprep.subr.mxu0 0.0
    %454 = vmatpush1.msra.mxu0 0.0
    %455 = vmatprep.subr.mxu0 0.0
    %456 = vmatpush1.msra.mxu0 0.0
    %457 = vmatprep.subr.mxu0 0.0
    %458 = vmatpush1.msra.mxu0 0.0
    %459 = vmatprep.subr.mxu0 0.0
    %460 = vmatpush1.msra.mxu0 0.0
    %461 = vmatprep.subr.mxu0 0.0
    %462 = vmatpush1.msra.mxu0 0.0
    %463 = vmatprep.subr.mxu0 0.0
    %464 = vmatpush1.msra.mxu0 0.0
    %465 = vmatprep.subr.mxu0 0.0
    %466 = vmatpush1.msra.mxu0 0.0
    %467 = vmatprep.subr.mxu0 0.0
    %468 = vmatpush1.msra.mxu0 0.0
    %469 = vmatprep.subr.mxu0 0.0
    %470 = vmatpush1.msra.mxu0 0.0
    %471 = vmatprep.subr.mxu0 0.0
    %472 = vmatpush1.msra.mxu0 0.0
    %473 = vmatprep.subr.mxu0 0.0
    %474 = vmatpush1.msra.mxu0 0.0
    %475 = vmatprep.subr.mxu0 0.0
    %476 = vmatpush1.msra.mxu0 0.0
    %477 = vmatprep.subr.mxu0 0.0
    %478 = vmatpush1.msra.mxu0 0.0
    %479 = vmatprep.subr.mxu0 0.0
    %480 = vmatpush1.msra.mxu0 0.0
    %481 = vmatprep.subr.mxu0 0.0
    %482 = vmatpush1.msra.mxu0 0.0
    %483 = vmatprep.subr.mxu0 0.0
    %484 = vmatpush1.msra.mxu0 0.0
    %485 = vmatprep.subr.mxu0 0.0
    %486 = vmatpush1.msra.mxu0 0.0
    %487 = vmatprep.subr.mxu0 0.0
    %488 = vmatpush1.msra.mxu0 0.0
    %489 = vmatprep.subr.mxu0 0.0
    %490 = vmatpush1.msra.mxu0 0.0
    %491 = vmatprep.subr.mxu0 0.0
    %492 = vmatpush1.msra.mxu0 0.0
    %493 = vmatprep.subr.mxu0 0.0
    %494 = vmatpush1.msra.mxu0 0.0
    %495 = vmatprep.mubr.f32.mxu0 0.0
    %v496 = vand.u32 %v56, 4294901760
    %497 = vmatmul.mubr.f32.gmra.mrb[0].mxu0 %v496
    %v498 = vpop.f32.mrb[0].mxu0
    %v499 = vadd.f32 %v408, %v498
    %v500 = vpop.f32.mrb[0].mxu0
    %501 = vmatprep.mubr.f32.mxu0 0.0
    %v502 = vand.u32 %v59, 4294901760
    %503 = vmatmul.mubr.f32.gmra.mrb[0].mxu0 %v502
    %v504 = vpop.f32.mrb[0].mxu0
    %v505 = vadd.f32 %v416, %v504
    %v506 = vpop.f32.mrb[0].mxu0
    %507 = vdwg.mxu0
    %508 = vmatprep.subr.mxu0 0.0
    %v509 = vand.u32 %v48, 4294901760
    %510 = vmatpush1.msra.mxu0 %v509
    %511 = vmatprep.subr.mxu0 0.0
    %v512 = vand.u32 %v49, 4294901760
    %513 = vmatpush1.msra.mxu0 %v512
    %514 = vmatprep.subr.mxu0 0.0
    %v515 = vand.u32 %v50, 4294901760
    %516 = vmatpush1.msra.mxu0 %v515
    %517 = vmatprep.subr.mxu0 0.0
    %v518 = vand.u32 %v51, 4294901760
    %519 = vmatpush1.msra.mxu0 %v518
    %520 = vmatprep.subr.mxu0 0.0
    %521 = vmatpush1.msra.mxu0 0.0
    %522 = vmatprep.subr.mxu0 0.0
    %523 = vmatpush1.msra.mxu0 0.0
    %524 = vmatprep.subr.mxu0 0.0
    %525 = vmatpush1.msra.mxu0 0.0
    %526 = vmatprep.subr.mxu0 0.0
    %527 = vmatpush1.msra.mxu0 0.0
    %528 = vmatprep.subr.mxu0 0.0
    %529 = vmatpush1.msra.mxu0 0.0
    %530 = vmatprep.subr.mxu0 0.0
    %531 = vmatpush1.msra.mxu0 0.0
    %532 = vmatprep.subr.mxu0 0.0
    %533 = vmatpush1.msra.mxu0 0.0
    %534 = vmatprep.subr.mxu0 0.0
    %535 = vmatpush1.msra.mxu0 0.0
    %536 = vmatprep.subr.mxu0 0.0
    %537 = vmatpush1.msra.mxu0 0.0
    %538 = vmatprep.subr.mxu0 0.0
    %539 = vmatpush1.msra.mxu0 0.0
    %540 = vmatprep.subr.mxu0 0.0
    %541 = vmatpush1.msra.mxu0 0.0
    %542 = vmatprep.subr.mxu0 0.0
    %543 = vmatpush1.msra.mxu0 0.0
    %544 = vmatprep.subr.mxu0 0.0
    %545 = vmatpush1.msra.mxu0 0.0
    %546 = vmatprep.subr.mxu0 0.0
    %547 = vmatpush1.msra.mxu0 0.0
    %548 = vmatprep.subr.mxu0 0.0
    %549 = vmatpush1.msra.mxu0 0.0
    %550 = vmatprep.subr.mxu0 0.0
    %551 = vmatpush1.msra.mxu0 0.0
    %552 = vmatprep.subr.mxu0 0.0
    %553 = vmatpush1.msra.mxu0 0.0
    %554 = vmatprep.subr.mxu0 0.0
    %555 = vmatpush1.msra.mxu0 0.0
    %556 = vmatprep.subr.mxu0 0.0
    %557 = vmatpush1.msra.mxu0 0.0
    %558 = vmatprep.subr.mxu0 0.0
    %559 = vmatpush1.msra.mxu0 0.0
    %560 = vmatprep.subr.mxu0 0.0
    %561 = vmatpush1.msra.mxu0 0.0
    %562 = vmatprep.subr.mxu0 0.0
    %563 = vmatpush1.msra.mxu0 0.0
    %564 = vmatprep.subr.mxu0 0.0
    %565 = vmatpush1.msra.mxu0 0.0
    %566 = vmatprep.subr.mxu0 0.0
    %567 = vmatpush1.msra.mxu0 0.0
    %568 = vmatprep.subr.mxu0 0.0
    %569 = vmatpush1.msra.mxu0 0.0
    %570 = vmatprep.subr.mxu0 0.0
    %571 = vmatpush1.msra.mxu0 0.0
    %572 = vmatprep.subr.mxu0 0.0
    %573 = vmatpush1.msra.mxu0 0.0
    %574 = vmatprep.subr.mxu0 0.0
    %575 = vmatpush1.msra.mxu0 0.0
    %576 = vmatprep.mubr.f32.mxu0 0.0
    %v577 = vand.u32 %v56, 4294901760
    %578 = vmatmul.mubr.f32.gmra.mrb[0].mxu0 %v577
    %v579 = vpop.f32.mrb[0].mxu0
    %v580 = vadd.f32 %v499, %v579
    %v581 = vpop.f32.mrb[0].mxu0
    %582 = vmatprep.mubr.f32.mxu0 0.0
    %v583 = vand.u32 %v59, 4294901760
    %584 = vmatmul.mubr.f32.gmra.mrb[0].mxu0 %v583
    %v585 = vpop.f32.mrb[0].mxu0
    %v586 = vadd.f32 %v505, %v585
    %v587 = vpop.f32.mrb[0].mxu0
    %588 = vdwg.mxu0
    %v589 = vmul.f32 %v46, %v46
    %v590 = vmul.f32 %v47, %v47
    %v591 = vsel %vm54, %v589, 0.0
    %592 = vadd.xlane.f32.xlu0 %v591
    %v593 = vpop.xlane.xlu0 %592
    %v594 = vsel %vm54, %v590, 0.0
    %595 = vadd.xlane.f32.xlu0 %v594
    %v596 = vpop.xlane.xlu0 %595
    %v598 = vlaneseq
    %v599 = vshrl.u32 %v598, 7
    %v600 = vsub.s32 0, %v599
    %v601 = vrot.slane %v52, %v600
    %v603 = vadd.f32 %v593, %v601
    %v604 = vadd.f32 %v596, %v601
    %v605 = vmul.f32 %v580, 2.0
    %v606 = vmul.f32 %v586, 2.0
    %v607 = vsub.f32 %v603, %v605
    %v608 = vsub.f32 %v604, %v606
    %v609 = vmax.f32 %v607, 0.0
    %v610 = vmax.f32 %v608, 0.0
    %v611 = vrsqrt.pop %v609
    %v612 = vmul.f32 %v609, %v611
    %vm613 = vcmp.eq.f32.partialorder %v609, inf
    %v614 = vsel %vm613, %v609, %v612
    %vm615 = vcmp.eq.f32.partialorder %v609, 0.0
    %v616 = vand.u32 %v609, 2147483648
    %v617 = vsel %vm615, %v616, %v614
    %v618 = vrsqrt.pop %v610
    %v619 = vmul.f32 %v610, %v618
    %vm620 = vcmp.eq.f32.partialorder %v610, inf
    %v621 = vsel %vm620, %v610, %v619
    %vm622 = vcmp.eq.f32.partialorder %v610, 0.0
    %v623 = vand.u32 %v610, 2147483648
    %v624 = vsel %vm622, %v623, %v621
    %625 = vmin.xlane.f32.xlu0 %v617
    %v626 = vpop.xlane.xlu0 %625
    %627 = vmin.xlane.f32.xlu0 %v624
    %v628 = vpop.xlane.xlu0 %627
    %v629 = vsub.f32 %v617, %v626
    %v630 = vsub.f32 %v624, %v628
    %631 = vadd.xlane.f32.xlu0 %v629
    %v632 = vpop.xlane.xlu0 %631
    %633 = vadd.xlane.f32.xlu0 %v630
    %v634 = vpop.xlane.xlu0 %633
    %v635 = vmul.f32 %v632, 0.0078125
    %v636 = vmul.f32 %v634, 0.0078125
    %v637 = vsub.f32 %v629, %v635
    %v638 = vsub.f32 %v630, %v636
    %v639 = vmul.f32 %v637, %v637
    %v640 = vmul.f32 %v638, %v638
    %641 = vadd.xlane.f32.xlu0 %v639
    %v642 = vpop.xlane.xlu0 %641
    %643 = vadd.xlane.f32.xlu0 %v640
    %v644 = vpop.xlane.xlu0 %643
    %v645 = vmul.f32 %v642, 0.007874016
    %v646 = vmul.f32 %v644, 0.007874016
    %v647 = vadd.f32 %v645, 1e-05
    %v648 = vadd.f32 %v646, 1e-05
    %v649 = vrsqrt.pop %v647
    %v650 = vrsqrt.pop %v648
    %v651 = vmul.f32 %v629, %v649
    %v652 = vmul.f32 %v630, %v650
    %v653 = vsub.f32 0.0, %v651
    %v654 = vsub.f32 0.0, %v652
    %v656 = vlaneseq
    %v657 = vshrl.u32 %v656, 7
    %v658 = vsub.s32 0, %v657
    %v659 = vrot.slane %v53, %v658
    %v661 = vmul.f32 %v653, %v659
    %v662 = vmul.f32 %v654, %v659
    %v663 = vmul.f32 %v661, 1.442695
    %v664 = vpow.pop %v663
    %v665 = vmul.f32 %v662, 1.442695
    %v666 = vpow.pop %v665
    %667 = vst [vmem:[#allocation7] sm:$0xff] %v664
    %668 = vst [vmem:[#allocation7 + $0x8] sm:$0xff] %v666
    // Predicated region
    $region26: #{tpu_custom_call.1} parent=1 // pred_check
      _
    $region27: #{tpu_custom_call.1} parent=1 // pred_check_branch
      %670 = sbr.rel (0) target = $region29
    $region28: #{tpu_custom_call.1} parent=1 // pred_region
      %s672 = ssub.s32 256, 256
      %673 = vsyncadd [#allocation4], %s672
      %s674 = sshll.u32 [#allocation7], 4
      %s675 = int_to_ptr.vmem [resolvable:$true] %s674
      %680 = dma.vmem_to_hbm [thread:$0]  %s675, 256, %s4, [#allocation4], 128, 128, 8
    $region29: #{tpu_custom_call.1} parent=1 // pred_fallthru
      _
    // Predicated region
    $region30: #{tpu_custom_call.1} parent=1 // pred_check
      _
    $region31: #{tpu_custom_call.1} parent=1 // pred_check_branch
      %682 = sbr.rel (0) target = $region33
    $region32: #{tpu_custom_call.1} parent=1 // pred_region
      %683 = dma.done [#allocation4], 256
    $region33: #{tpu_custom_call.1} parent=1 // pred_fallthru
      _
    %684 = vsyncpa [#allocation3], 1
    %685 = vsyncpa [#allocation6], 1
    %686 = vsyncpa [#allocation4], 1

</llo_original>
